<compile_context>
chip_gen: v5e
topology: v5e:2x2
jax: 0.10.0
libtpu: 0.0.40
codegen_flags: <defaults>
</compile_context>

<pallas_src>
import functools

import jax
import jax.numpy as jnp
from jax.experimental import pallas as pl
from jax.experimental.pallas import tpu as pltpu


def _round_up(x, m):
    return ((x + m - 1) // m) * m


def _pow_static(x, gamma):
    """x ** gamma with gamma a static Python number.

    Small integer exponents are expanded to VALU multiplies (binary
    exponentiation) so the single EUP slot is only used by jnp.log.
    """
    g = float(gamma)
    if g.is_integer() and 0 <= int(g) <= 16:
        n = int(g)
        if n == 0:
            return jnp.ones_like(x)
        result = None
        base = x
        while n:
            if n & 1:
                result = base if result is None else result * base
            n >>= 1
            if n:
                base = base * base
        return result
    return x ** g


def _focal_loss_kernel(prd_ref, trg_ref, out_ref, *, alpha, gamma,
                       batch_size, block_rows):
    prd = prd_ref[...]                       # (TB, C) float32
    trg = trg_ref[...]                       # (TB, 1) int32
    tb, c = prd.shape

    # Gather p_i = prd[i, trg[i]] via one-hot mask + row reduction (no direct
    # vector gather on TPU for per-row data-dependent indices).
    class_ids = jax.lax.broadcasted_iota(jnp.int32, (tb, c), dimension=1)
    onehot = class_ids == trg                # broadcast (TB,1) -> (TB,C)
    p = jnp.sum(jnp.where(onehot, prd, 0.0), axis=1, keepdims=True)  # (TB,1)

    logp = jnp.log(p)                        # EUP
    modulator = _pow_static(1.0 - logp, gamma)   # VALU multiplies for int gamma
    per_sample = (-alpha) * modulator * logp     # (TB, 1)

    # Mask padded rows (rows >= batch_size contribute 0 to the loss).
    row_ids = (pl.program_id(0) * block_rows
               + jax.lax.broadcasted_iota(jnp.int32, (tb, 1), dimension=0))
    per_sample = jnp.where(row_ids < batch_size, per_sample, 0.0)

    # Per-block partial sum, broadcast to a full (8,128) tile -> unmasked vst.
    partial = jnp.sum(per_sample)
    out_ref[...] = jnp.broadcast_to(partial, out_ref.shape).astype(out_ref.dtype)


def focal_loss(prd, trg, *, alpha, gamma, block_rows=None):
    """prd: (B, C) float32 probabilities; trg: (B,) int labels. Returns scalar."""
    B, C = prd.shape
    prd = prd.astype(jnp.float32)
    trg = trg.astype(jnp.int32)

    # --- choose batch tile size --------------------------------------------
    # VMEM footprint per row is lane-padded: round_up(C,128) * 4 bytes (f32)
    # for prd plus 128 * 4 bytes for the (TB,1) int32 label tile.  Target
    # ~1 MiB per prd pipeline buffer so 2 inputs x 2 buffers stay well under
    # the scoped-VMEM default on every generation (v5e 16 MiB ... v7x 32 MiB).
    if block_rows is None:
        lane_c = _round_up(C, 128)
        cap = max(8, ((1 << 20) // (lane_c * 4)) // 8 * 8)
        block_rows = min(_round_up(B, 8), cap)
    block_rows = max(8, _round_up(block_rows, 8))

    padded_B = _round_up(B, block_rows)
    num_blocks = padded_B // block_rows

    # Pad with benign rows: prd=1 -> log(1)=0 -> zero loss; also masked in-kernel.
    pad = padded_B - B
    if pad:
        prd = jnp.concatenate([prd, jnp.ones((pad, C), jnp.float32)], axis=0)
        trg = jnp.concatenate([trg, jnp.zeros((pad,), jnp.int32)], axis=0)
    trg2d = trg.reshape(padded_B, 1)

    kernel = functools.partial(
        _focal_loss_kernel, alpha=float(alpha), gamma=float(gamma),
        batch_size=B, block_rows=block_rows)

    partials = pl.pallas_call(
        kernel,
        out_shape=jax.ShapeDtypeStruct((num_blocks, 8, 128), jnp.float32),
        grid=(num_blocks,),
        in_specs=[
            pl.BlockSpec((block_rows, C), lambda i: (i, 0)),
            pl.BlockSpec((block_rows, 1), lambda i: (i, 0)),
        ],
        out_specs=pl.BlockSpec((1, 8, 128), lambda i: (i, 0, 0)),
        compiler_params=pltpu.CompilerParams(
            dimension_semantics=("parallel",)),
    )(prd, trg2d)

    # Tiny final reduction over per-block partial sums in plain JAX.
    return jnp.sum(partials[:, 0, 0])


def focal_loss_ref(prd, trg, *, alpha, gamma):
    """Pure-JAX reference mirroring the PyTorch loop."""
    p = jnp.take_along_axis(prd, trg.reshape(-1, 1).astype(jnp.int32),
                            axis=1)[:, 0]
    logp = jnp.log(p)
    return jnp.sum(-alpha * (1.0 - logp) ** gamma * logp)


if __name__ == "__main__":
    key = jax.random.PRNGKey(0)
    k1, k2 = jax.random.split(key)

    B, C = 8, 4          # batch_size=8, class_nums=4
    alpha, gamma = 0.25, 2.0

    # Deterministic synthetic inputs: probabilities in (0, 1), integer labels.
    prd = jax.random.uniform(k1, (B, C), dtype=jnp.float32,
                             minval=0.05, maxval=0.95)
    trg = jax.random.randint(k2, (B,), 0, C, dtype=jnp.int32)

    loss = focal_loss(prd, trg, alpha=alpha, gamma=gamma)
    loss = jax.block_until_ready(loss)

    ref = focal_loss_ref(prd, trg, alpha=alpha, gamma=gamma)
    assert jnp.allclose(loss, ref, rtol=1e-5, atol=1e-5), (loss, ref)

    print("KERNEL_OK")
</pallas_src>

<mosaic_0001>
module attributes {stable_mosaic.version = 11 : i64} {
  func.func @_focal_loss_kernel(%arg0: i32, %arg1: memref<8x4xf32, #tpu.memory_space<vmem>>, %arg2: memref<8x1xi32, #tpu.memory_space<vmem>>, %arg3: memref<1x8x128xf32, #tpu.memory_space<vmem>>) attributes {dimension_semantics = [#tpu.dimension_semantics<parallel>], iteration_bounds = array<i64: 1>, scalar_prefetch = 0 : i64, scratch_operands = 0 : i64, tpu.core_type = #tpu.core_type<tc>, window_params = [{transform_indices = @transform_0, window_bounds = array<i64: 8, 4>}, {transform_indices = @transform_1, window_bounds = array<i64: 8, 1>}, {transform_indices = @transform_2, window_bounds = array<i64: 1, 8, 128>}]} {
    %c0 = arith.constant 0 : index
    %c0_0 = arith.constant 0 : index
    %0 = vector.load %arg1[%c0, %c0_0] : memref<8x4xf32, #tpu.memory_space<vmem>>, vector<8x4xf32>
    %c0_1 = arith.constant 0 : index
    %c0_2 = arith.constant 0 : index
    %1 = vector.load %arg2[%c0_1, %c0_2] : memref<8x1xi32, #tpu.memory_space<vmem>>, vector<8x1xi32>
    %2 = tpu.iota {dimensions = array<i32: 1>} : vector<8x4xi32>
    %3 = vector.broadcast %1 : vector<8x1xi32> to vector<8x4xi32>
    %4 = arith.cmpi eq, %2, %3 : vector<8x4xi32>
    %cst = arith.constant 0.000000e+00 : f32
    %5 = vector.broadcast %cst : f32 to vector<8x4xf32>
    %6 = arith.select %4, %0, %5 : vector<8x4xi1>, vector<8x4xf32>
    %cst_3 = arith.constant dense<0.000000e+00> : vector<8xf32>
    %7 = vector.multi_reduction <add>, %6, %cst_3 [1] : vector<8x4xf32> to vector<8xf32>
    %8 = vector.shape_cast %7 : vector<8xf32> to vector<8x1xf32>
    %9 = math.log %8 : vector<8x1xf32>
    %cst_4 = arith.constant 1.000000e+00 : f32
    %10 = vector.broadcast %cst_4 : f32 to vector<8x1xf32>
    %11 = arith.subf %10, %9 : vector<8x1xf32>
    %12 = arith.mulf %11, %11 : vector<8x1xf32>
    %cst_5 = arith.constant -2.500000e-01 : f32
    %13 = vector.broadcast %cst_5 : f32 to vector<8x1xf32>
    %14 = arith.mulf %13, %12 : vector<8x1xf32>
    %15 = arith.mulf %14, %9 : vector<8x1xf32>
    %c8_i32 = arith.constant 8 : i32
    %16 = arith.muli %arg0, %c8_i32 : i32
    %17 = tpu.iota {dimensions = array<i32: 0>} : vector<8x1xi32>
    %18 = vector.broadcast %16 : i32 to vector<8x1xi32>
    %19 = arith.addi %18, %17 : vector<8x1xi32>
    %c8_i32_6 = arith.constant 8 : i32
    %20 = vector.broadcast %c8_i32_6 : i32 to vector<8x1xi32>
    %21 = arith.cmpi slt, %19, %20 : vector<8x1xi32>
    %cst_7 = arith.constant 0.000000e+00 : f32
    %22 = vector.broadcast %cst_7 : f32 to vector<8x1xf32>
    %23 = arith.select %21, %15, %22 : vector<8x1xi1>, vector<8x1xf32>
    %24 = vector.shape_cast %23 : vector<8x1xf32> to vector<1x8x1xf32>
    %cst_8 = arith.constant dense<0.000000e+00> : vector<1xf32>
    %25 = vector.multi_reduction <add>, %24, %cst_8 [1, 2] : vector<1x8x1xf32> to vector<1xf32>
    %26 = vector.shape_cast %25 : vector<1xf32> to vector<1x1x1xf32>
    %27 = vector.extract %26[0, 0, 0] : f32 from vector<1x1x1xf32>
    %28 = vector.broadcast %27 : f32 to vector<1x8x128xf32>
    %c0_9 = arith.constant 0 : index
    %c0_10 = arith.constant 0 : index
    %c0_11 = arith.constant 0 : index
    %29 = vector.load %arg3[%c0_9, %c0_10, %c0_11] : memref<1x8x128xf32, #tpu.memory_space<vmem>>, vector<1x8x128xf32>
    tpu.vector_store %arg3[%c0_9, %c0_10, %c0_11], %28 {strides = array<i32>} : memref<1x8x128xf32, #tpu.memory_space<vmem>>, vector<1x8x128xf32>,
    return
  }
  func.func @transform_0(%arg0: i32) -> (i32, i32) {
    %c0_i32 = arith.constant 0 : i32
    %c0_i32_0 = arith.constant 0 : i32
    return %arg0, %c0_i32 : i32, i32
  }
  func.func @transform_1(%arg0: i32) -> (i32, i32) {
    %c0_i32 = arith.constant 0 : i32
    %c0_i32_0 = arith.constant 0 : i32
    return %arg0, %c0_i32 : i32, i32
  }
  func.func @transform_2(%arg0: i32) -> (i32, i32, i32) {
    %c0_i32 = arith.constant 0 : i32
    %c0_i32_0 = arith.constant 0 : i32
    %c0_i32_1 = arith.constant 0 : i32
    return %arg0, %c0_i32, %c0_i32_0 : i32, i32, i32
  }
}

</mosaic_0001>

<llo_original>
// kernel: tpu_custom_call.1
$region0: #{tpu_custom_call.1}
  #allocation0 [shape = 'u32[]', space=smem, size = 0x4, offset = 0x4, fixed_abs, tag = 'smem constant byte address 0x4 - core index']
  #allocation1 [shape = 'u32[72,128]{1,0:T(1,128)}', space=vmem, size = 0x9000, scoped, tag = 'internal scratch']
  %s0 = inlined_call_operand.vmem [shape: f32[8,4], index: 0, kind: input, shape index: {}]
  %s1 = inlined_call_operand.vmem [shape: s32[8,1], index: 1, kind: input, shape index: {}]
  %s2 = inlined_call_operand.hbm [shape: f32[1,8,128], index: 2, kind: output, shape index: {}]
  %s3 = sld [smem:[#allocation0]]
  $region18: #{tpu_custom_call.1} parent=0
    _
  %s5 = ssub.s32 1, %s3
  %s6 = scalar_select 0, %s5, %s3
  $region1: #{tpu_custom_call.1} parent=0
    #allocation2 [shape = 'u8[4096]{0}', space=vmem, size = 0x1000, scoped, tag = 'output window, operand 0, single buffered']
    #allocation3 [shape = 's32[1]{0}', space=sflag, size = 0x4, scoped, tag = 'scoped memory for tpu_custom_call.1']
    %7 = vsyncpa [#allocation3], 0
    // Predicated region
    $region2: #{tpu_custom_call.1} parent=1 // pred_check
      _
    $region3: #{tpu_custom_call.1} parent=1 // pred_check_branch
      %9 = sbr.rel (0) target = $region5
    $region4: #{tpu_custom_call.1} parent=1 // pred_region
      _
    $region5: #{tpu_custom_call.1} parent=1 // pred_fallthru
      _
    // Predicated region
    $region6: #{tpu_custom_call.1} parent=1 // pred_check
      _
    $region7: #{tpu_custom_call.1} parent=1 // pred_check_branch
      %11 = sbr.rel (0) target = $region9
    $region8: #{tpu_custom_call.1} parent=1 // pred_region
      _
    $region9: #{tpu_custom_call.1} parent=1 // pred_fallthru
      _
    %v12 = vld [vmem:[%s0] sm:$0xff]
    %v13 = vld [vmem:[%s1] sm:$0xff]
    %v14 = vlaneseq
    %v15 = vand.u32 %v14, 127
    %16 = vset.pattern.permute.xlu0 0
    %17 = vperm.xlu0 %16, %v13
    %v18 = vpop.permute.xlu0 %17
    %vm19 = vcmp.eq.s32.totalorder %v15, %v18
    %v20 = vsel %vm19, %v12, 0.0
    %vm21 = vcmask 31744
    %v22 = vsel %vm21, %v20, 0.0
    %23 = vadd.xlane.f32.xlu0 %v22
    %v24 = vpop.xlane.xlu0 %23
    %v25 = vlog2.pop %v24
    %v26 = vmul.f32 %v25, 0.6931472
    %v27 = vsub.f32 1.0, %v26
    %v28 = vmul.f32 %v27, %v27
    %v29 = vmul.f32 %v28, -0.25
    %v30 = vmul.f32 %v29, %v26
    %s31 = smul.u32 0, 8
    %v32 = vlaneseq
    %v33 = vshrl.u32 %v32, 7
    %v34 = vstv %s31
    %v35 = vadd.s32 %v34, %v33
    %vm36 = vcmp.lt.s32.totalorder %v35, 8
    %v37 = vsel %vm36, %v30, 0.0
    %vm38 = vcmask 7168
    %v39 = vsel %vm38, %v37, 0.0
    %40 = vadd.xlane.f32.xlu0 %v39
    %v41 = vpop.xlane.xlu0 %40
    %v42 = vrot.slane %v41, 4
    %v43 = vadd.f32 %v41, %v42
    %v44 = vrot.slane %v43, 2
    %v45 = vadd.f32 %v43, %v44
    %v46 = vrot.slane %v45, 1
    %v47 = vadd.f32 %v45, %v46
    %s48 = vtos %v47
    %v49 = vstv %s48
    %50 = vst [vmem:[#allocation2] sm:$0xff] %v49
    // Predicated region
    $region10: #{tpu_custom_call.1} parent=1 // pred_check
      _
    $region11: #{tpu_custom_call.1} parent=1 // pred_check_branch
      %52 = sbr.rel (0) target = $region13
    $region12: #{tpu_custom_call.1} parent=1 // pred_region
      %54 = vsyncadd [#allocation3], 0
      %s56 = sshll.u32 [#allocation2], 4
      %s57 = int_to_ptr.vmem [resolvable:$true] %s56
      %s58 = sshll.u32 %s2, 4
      %s59 = int_to_ptr.hbm [resolvable:$true] %s58
      %61 = dma.vmem_to_hbm [thread:$0]  %s57, 128, %s59, [#allocation3]
    $region13: #{tpu_custom_call.1} parent=1 // pred_fallthru
      _
    // Predicated region
    $region14: #{tpu_custom_call.1} parent=1 // pred_check
      _
    $region15: #{tpu_custom_call.1} parent=1 // pred_check_branch
      %63 = sbr.rel (0) target = $region17
    $region16: #{tpu_custom_call.1} parent=1 // pred_region
      %65 = dma.done [#allocation3], 128
    $region17: #{tpu_custom_call.1} parent=1 // pred_fallthru
      _
    %66 = vsyncpa [#allocation3], 1

</llo_original>
